<compile_context>
chip_gen: v7x
topology: tpu7x:2x2x1
jax: 0.10.0
libtpu: 0.0.40
codegen_flags: <defaults>
</compile_context>

<pallas_src>
import jax
import jax.numpy as jnp
from jax.experimental import pallas as pl
from jax.experimental.pallas import tpu as pltpu

EPS = 1e-5  # torch.nn.BatchNorm1d default


def _bn_relu(v, gamma, beta, inv_n):
    # Training-mode (biased) batch statistics, single pass: var = E[x^2] - mean^2.
    mean = jnp.sum(v, axis=0, keepdims=True) * inv_n
    ex2 = jnp.sum(v * v, axis=0, keepdims=True) * inv_n
    var = jnp.maximum(ex2 - mean * mean, 0.0)
    v = (v - mean) * jax.lax.rsqrt(var + EPS) * gamma + beta
    return jnp.maximum(v, 0.0)  # ReLU


def gnn_kernel(x_ref, adj_ref, pool_ref, w_big_ref, w_small_ref, vec_ref, out_ref):
    n = x_ref.shape[0]
    inv_n = 1.0 / n

    x = x_ref[...]                           # [N, 16] f32 (cols 9:16 zero-padded)
    adj = adj_ref[...]                       # [N, N]  bf16
    w_big = w_big_ref[...]                   # [256, 128] bf16 packed GraphConv weights
    w_small = w_small_ref[...]               # [64, 128]  f32 packed node/head weights
    vecs = vec_ref[...]                      # [16, 128]  f32 packed biases / BN params

    # node embedding: Linear(9, 64)  (input zero-padded 9 -> 16)
    h = (jnp.dot(x, w_small[0:16, 0:64], preferred_element_type=jnp.float32)
         + vecs[0:1, 0:64])                                                  # [N, 64]

    # ---- GraphConv(64, 128) + BN + ReLU ------------------------------------
    # out = (adj @ h) @ W1_rel + b1 + h @ W1_root
    # fused as [agg | h] @ [W1_rel ; W1_root]  (single [N,128]@[128,128] MXU call)
    agg = jnp.dot(adj, h.astype(jnp.bfloat16),
                  preferred_element_type=jnp.float32)                        # [N, 64]
    ah = jnp.concatenate([agg, h], axis=1).astype(jnp.bfloat16)              # [N, 128]
    out1 = (jnp.dot(ah, w_big[0:128, :], preferred_element_type=jnp.float32)
            + vecs[1:2, :])                                                  # [N, 128]
    h1 = _bn_relu(out1, vecs[2:3, :], vecs[3:4, :], inv_n)                   # [N, 128]

    # ---- GraphConv(128, 32) + BN + ReLU ------------------------------------
    # reassociated: adj @ (h1 @ W2_rel) + h1 @ W2_root + b2,
    # with W2_rel | W2_root fused into one [N,128]@[128,128] matmul (zero-padded).
    m = jnp.dot(h1.astype(jnp.bfloat16), w_big[128:256, :],
                preferred_element_type=jnp.float32)                          # [N, 128]
    agg2 = jnp.dot(adj, m[:, 0:32].astype(jnp.bfloat16),
                   preferred_element_type=jnp.float32)                       # [N, 32]
    out2 = agg2 + m[:, 32:64] + vecs[4:5, 0:32]
    h2 = _bn_relu(out2, vecs[5:6, 0:32], vecs[6:7, 0:32], inv_n)             # [N, 32]

    # global mean pool as dense matmul: [B, N] @ [N, 32]
    g = jnp.dot(pool_ref[...], h2, preferred_element_type=jnp.float32)       # [B, 32]

    # prediction head (forward() returns pre-softmax logits), lane-padded to 128
    p = jnp.maximum(
        jnp.dot(g, w_small[16:48, 0:16], preferred_element_type=jnp.float32)
        + vecs[7:8, 0:16], 0.0)                                              # [B, 16]
    out_ref[...] = (jnp.dot(p, w_small[48:64, :],
                            preferred_element_type=jnp.float32)
                    + vecs[8:9, :])                                          # [B, 128]


def _pad_row(v, width=128):
    v = jnp.asarray(v, jnp.float32).reshape(1, -1)
    return jnp.pad(v, ((0, 0), (0, width - v.shape[1])))


def pack_params(params):
    """Pack all kernel-side parameters into 3 VMEM blobs."""
    # fused GraphConv weights (bf16 operands for the MXU)
    w1 = jnp.concatenate([params["c1_w_rel"], params["c1_w_root"]], axis=0)  # [128,128]
    w2 = jnp.concatenate([params["c2_w_rel"], params["c2_w_root"]], axis=1)  # [128, 64]
    w2 = jnp.pad(w2, ((0, 0), (0, 64)))                                      # [128,128]
    w_big = jnp.concatenate([w1, w2], axis=0).astype(jnp.bfloat16)           # [256,128]

    node_w = jnp.pad(params["node_w"], ((0, 7), (0, 64)))                    # [16,128]
    lin1_w = jnp.pad(params["lin1_w"], ((0, 0), (0, 112)))                   # [32,128]
    lin2_w = jnp.pad(params["lin2_w"], ((0, 0), (0, 126)))                   # [16,128]
    w_small = jnp.concatenate([node_w, lin1_w, lin2_w],
                              axis=0).astype(jnp.float32)                    # [64,128]

    rows = [
        _pad_row(params["node_b"]),    # 0
        _pad_row(params["c1_b_rel"]),  # 1
        _pad_row(params["bn1_g"]),     # 2
        _pad_row(params["bn1_b"]),     # 3
        _pad_row(params["c2_b_rel"]),  # 4
        _pad_row(params["bn2_g"]),     # 5
        _pad_row(params["bn2_b"]),     # 6
        _pad_row(params["lin1_b"]),    # 7
        _pad_row(params["lin2_b"]),    # 8
    ]
    vecs = jnp.concatenate(
        rows + [jnp.zeros((16 - len(rows), 128), jnp.float32)], axis=0)      # [16,128]
    return w_big, w_small, vecs


def gnn_forward(xs, edge_indices, edge_attrs, batches, params, num_graphs):
    """Forward pass of GNN_Net over G independent mini-batches (one grid step each).

    xs:            [G, N, 9]  node features
    edge_indices:  [G, 2, E]  int (src, dst)
    edge_attrs:    [G, E, 3]  edge features
    batches:       [G, N]     graph id per node, in [0, num_graphs)
    returns        [G, num_graphs, 2] pre-softmax logits (as torch forward()).
    """
    G, N, _ = xs.shape
    B = num_graphs

    xs = xs.astype(jnp.float32)
    xs_p = jnp.pad(xs, ((0, 0), (0, 0), (0, 16 - xs.shape[-1])))             # [G, N, 16]

    # edge_emb: Linear(3, 1) -> per-edge scalar weight, scattered into dense adjacency
    # A[dst, src] = w  (GraphConv aggregates messages from src at dst, aggr='add').
    # TODO(synk): for large sparse graphs replace this dense O(N^2) adjacency with a
    # scalar-prefetch CSR/edge-gather Pallas kernel (PrefetchScalarGridSpec + gather).
    def build_adj(edge_index, edge_attr):
        ew = edge_attr.astype(jnp.float32) @ params["edge_w"] + params["edge_b"]
        adj = jnp.zeros((N, N), jnp.float32).at[edge_index[1],
                                                edge_index[0]].add(ew[:, 0])
        return adj.astype(jnp.bfloat16)

    adjs = jax.vmap(build_adj)(edge_indices, edge_attrs)                     # [G, N, N]

    def build_pool(batch):
        onehot = (batch[None, :] == jnp.arange(B)[:, None]).astype(jnp.float32)
        return onehot / jnp.maximum(onehot.sum(axis=1, keepdims=True), 1.0)

    pools = jax.vmap(build_pool)(batches)                                    # [G, B, N]

    w_big, w_small, vecs = pack_params(params)

    grid_spec = pltpu.PrefetchScalarGridSpec(
        num_scalar_prefetch=0,
        grid=(G,),
        in_specs=[
            pl.BlockSpec((None, N, 16), lambda g: (g, 0, 0)),   # x
            pl.BlockSpec((None, N, N), lambda g: (g, 0, 0)),    # adjacency (bf16)
            pl.BlockSpec((None, B, N), lambda g: (g, 0, 0)),    # pooling matrix
            pl.BlockSpec((256, 128), lambda g: (0, 0)),         # packed conv weights
            pl.BlockSpec((64, 128), lambda g: (0, 0)),          # packed node/head weights
            pl.BlockSpec((16, 128), lambda g: (0, 0)),          # packed biases / BN params
        ],
        out_specs=pl.BlockSpec((None, B, 128), lambda g: (g, 0, 0)),
    )
    out = pl.pallas_call(
        gnn_kernel,
        out_shape=jax.ShapeDtypeStruct((G, B, 128), jnp.float32),
        grid_spec=grid_spec,
        compiler_params=pltpu.CompilerParams(
            dimension_semantics=("parallel",),      # 2 TCs on v7x
            vmem_limit_bytes=32 * 1024 * 1024,
        ),
    )(xs_p, adjs, pools, w_big, w_small, vecs)
    return out[:, :, :2]                                                      # [G, B, 2]


def init_params(key):
    def lin(k, fan_in, fan_out, bias=True):
        bound = 1.0 / (fan_in ** 0.5)
        kw, kb = jax.random.split(k)
        w = jax.random.uniform(kw, (fan_in, fan_out), jnp.float32, -bound, bound)
        b = (jax.random.uniform(kb, (1, fan_out), jnp.float32, -bound, bound)
             if bias else None)
        return w, b

    ks = jax.random.split(key, 8)
    p = {}
    p["node_w"], p["node_b"] = lin(ks[0], 9, 64)
    p["edge_w"], p["edge_b"] = lin(ks[1], 3, 1)
    # GraphConv(64, 128): lin_rel has bias, lin_root has no bias
    p["c1_w_rel"], p["c1_b_rel"] = lin(ks[2], 64, 128)
    p["c1_w_root"], _ = lin(ks[3], 64, 128, bias=False)
    p["bn1_g"] = jnp.ones((1, 128), jnp.float32)
    p["bn1_b"] = jnp.zeros((1, 128), jnp.float32)
    # GraphConv(128, 32)
    p["c2_w_rel"], p["c2_b_rel"] = lin(ks[4], 128, 32)
    p["c2_w_root"], _ = lin(ks[5], 128, 32, bias=False)
    p["bn2_g"] = jnp.ones((1, 32), jnp.float32)
    p["bn2_b"] = jnp.zeros((1, 32), jnp.float32)
    p["lin1_w"], p["lin1_b"] = lin(ks[6], 32, 16)
    p["lin2_w"], p["lin2_b"] = lin(ks[7], 16, 2)
    return p


if __name__ == "__main__":
    key = jax.random.PRNGKey(0)
    k_x, k_ea, k_src, k_dst, k_p = jax.random.split(key, 5)

    G, N, E, B = 2, 16, 32, 2   # 2 mini-batches, 16 nodes / 32 edges / 2 graphs each
    xs = jax.random.normal(k_x, (G, N, 9), jnp.float32)
    edge_attrs = jax.random.normal(k_ea, (G, E, 3), jnp.float32)
    src = jax.random.randint(k_src, (G, E), 0, N, dtype=jnp.int32)
    dst = jax.random.randint(k_dst, (G, E), 0, N, dtype=jnp.int32)
    edge_indices = jnp.stack([src, dst], axis=1)                   # [G, 2, E]
    batch = jnp.concatenate([jnp.zeros(N // 2, jnp.int32),
                             jnp.ones(N - N // 2, jnp.int32)])     # [N]
    batches = jnp.tile(batch[None, :], (G, 1))                     # [G, N]

    params = init_params(k_p)

    pred = gnn_forward(xs, edge_indices, edge_attrs, batches, params, num_graphs=B)
    pred = jax.block_until_ready(pred)
    assert pred.shape == (G, B, 2) and pred.dtype == jnp.float32
    assert bool(jnp.all(jnp.isfinite(pred)))
    print("KERNEL_OK")
</pallas_src>

<mosaic_0001>
module attributes {stable_mosaic.version = 11 : i64} {
  func.func @gnn_kernel(%arg0: i32, %arg1: memref<1x16x16xf32, #tpu.memory_space<vmem>>, %arg2: memref<1x16x16xbf16, #tpu.memory_space<vmem>>, %arg3: memref<1x2x16xf32, #tpu.memory_space<vmem>>, %arg4: memref<256x128xbf16, #tpu.memory_space<vmem>>, %arg5: memref<64x128xf32, #tpu.memory_space<vmem>>, %arg6: memref<16x128xf32, #tpu.memory_space<vmem>>, %arg7: memref<1x2x128xf32, #tpu.memory_space<vmem>>) attributes {dimension_semantics = [#tpu.dimension_semantics<parallel>], iteration_bounds = array<i64: 2>, scalar_prefetch = 0 : i64, scratch_operands = 0 : i64, tpu.core_type = #tpu.core_type<tc>, window_params = [{transform_indices = @transform_0, window_bounds = array<i64: 1, 16, 16>}, {transform_indices = @transform_1, window_bounds = array<i64: 1, 16, 16>}, {transform_indices = @transform_2, window_bounds = array<i64: 1, 2, 16>}, {pipeline_mode = #tpu.pipeline_mode<synchronous>, transform_indices = @transform_3, window_bounds = array<i64: 256, 128>}, {pipeline_mode = #tpu.pipeline_mode<synchronous>, transform_indices = @transform_4, window_bounds = array<i64: 64, 128>}, {pipeline_mode = #tpu.pipeline_mode<synchronous>, transform_indices = @transform_5, window_bounds = array<i64: 16, 128>}, {transform_indices = @transform_6, window_bounds = array<i64: 1, 2, 128>}]} {
    %c0 = arith.constant 0 : index
    %c0_0 = arith.constant 0 : index
    %c0_1 = arith.constant 0 : index
    %0 = vector.load %arg1[%c0, %c0_0, %c0_1] : memref<1x16x16xf32, #tpu.memory_space<vmem>>, vector<1x16x16xf32>
    %1 = vector.shape_cast %0 : vector<1x16x16xf32> to vector<16x16xf32>
    %c0_2 = arith.constant 0 : index
    %c0_3 = arith.constant 0 : index
    %c0_4 = arith.constant 0 : index
    %2 = vector.load %arg2[%c0_2, %c0_3, %c0_4] : memref<1x16x16xbf16, #tpu.memory_space<vmem>>, vector<1x16x16xbf16>
    %3 = vector.shape_cast %2 : vector<1x16x16xbf16> to vector<16x16xbf16>
    %c0_5 = arith.constant 0 : index
    %c0_6 = arith.constant 0 : index
    %4 = vector.load %arg4[%c0_5, %c0_6] : memref<256x128xbf16, #tpu.memory_space<vmem>>, vector<256x128xbf16>
    %c0_7 = arith.constant 0 : index
    %c0_8 = arith.constant 0 : index
    %5 = vector.load %arg5[%c0_7, %c0_8] : memref<64x128xf32, #tpu.memory_space<vmem>>, vector<64x128xf32>
    %c0_9 = arith.constant 0 : index
    %c0_10 = arith.constant 0 : index
    %6 = vector.load %arg6[%c0_9, %c0_10] : memref<16x128xf32, #tpu.memory_space<vmem>>, vector<16x128xf32>
    %7 = vector.extract_strided_slice %5 {offsets = [0, 0], sizes = [16, 64], strides = [1, 1]} : vector<64x128xf32> to vector<16x64xf32>
    %cst = arith.constant dense<0.000000e+00> : vector<16x64xf32>
    %8 = tpu.matmul %1, %7, %cst {dimension_numbers = #tpu.dot_dimension_numbers<[1], [0], [0], [1], [0, 0, 1, 1], [], []>} : vector<16x16xf32>, vector<16x64xf32>, vector<16x64xf32> -> vector<16x64xf32>
    %9 = vector.extract_strided_slice %6 {offsets = [0, 0], sizes = [1, 64], strides = [1, 1]} : vector<16x128xf32> to vector<1x64xf32>
    %10 = vector.broadcast %9 : vector<1x64xf32> to vector<16x64xf32>
    %11 = arith.addf %8, %10 : vector<16x64xf32>
    %12 = arith.truncf %11 : vector<16x64xf32> to vector<16x64xbf16>
    %cst_11 = arith.constant dense<0.000000e+00> : vector<16x64xf32>
    %13 = tpu.matmul %3, %12, %cst_11 {dimension_numbers = #tpu.dot_dimension_numbers<[1], [0], [0], [1], [0, 0, 1, 1], [], []>} : vector<16x16xbf16>, vector<16x64xbf16>, vector<16x64xf32> -> vector<16x64xf32>
    %14 = tpu.concatenate %13, %11 in 1 : vector<16x64xf32>, vector<16x64xf32> -> vector<16x128xf32>
    %15 = arith.truncf %14 : vector<16x128xf32> to vector<16x128xbf16>
    %16 = vector.extract_strided_slice %4 {offsets = [0, 0], sizes = [128, 128], strides = [1, 1]} : vector<256x128xbf16> to vector<128x128xbf16>
    %cst_12 = arith.constant dense<0.000000e+00> : vector<16x128xf32>
    %17 = tpu.matmul %15, %16, %cst_12 {dimension_numbers = #tpu.dot_dimension_numbers<[1], [0], [0], [1], [0, 0, 1, 1], [], []>} : vector<16x128xbf16>, vector<128x128xbf16>, vector<16x128xf32> -> vector<16x128xf32>
    %18 = vector.extract_strided_slice %6 {offsets = [1, 0], sizes = [1, 128], strides = [1, 1]} : vector<16x128xf32> to vector<1x128xf32>
    %19 = vector.broadcast %18 : vector<1x128xf32> to vector<16x128xf32>
    %20 = arith.addf %17, %19 : vector<16x128xf32>
    %21 = vector.extract_strided_slice %6 {offsets = [2, 0], sizes = [1, 128], strides = [1, 1]} : vector<16x128xf32> to vector<1x128xf32>
    %22 = vector.extract_strided_slice %6 {offsets = [3, 0], sizes = [1, 128], strides = [1, 1]} : vector<16x128xf32> to vector<1x128xf32>
    %cst_13 = arith.constant dense<0.000000e+00> : vector<128xf32>
    %23 = vector.multi_reduction <add>, %20, %cst_13 [0] : vector<16x128xf32> to vector<128xf32>
    %24 = vector.shape_cast %23 : vector<128xf32> to vector<1x128xf32>
    %cst_14 = arith.constant 6.250000e-02 : f32
    %25 = vector.broadcast %cst_14 : f32 to vector<1x128xf32>
    %26 = arith.mulf %24, %25 : vector<1x128xf32>
    %27 = arith.mulf %20, %20 : vector<16x128xf32>
    %cst_15 = arith.constant dense<0.000000e+00> : vector<128xf32>
    %28 = vector.multi_reduction <add>, %27, %cst_15 [0] : vector<16x128xf32> to vector<128xf32>
    %29 = vector.shape_cast %28 : vector<128xf32> to vector<1x128xf32>
    %cst_16 = arith.constant 6.250000e-02 : f32
    %30 = vector.broadcast %cst_16 : f32 to vector<1x128xf32>
    %31 = arith.mulf %29, %30 : vector<1x128xf32>
    %32 = arith.mulf %26, %26 : vector<1x128xf32>
    %33 = arith.subf %31, %32 : vector<1x128xf32>
    %cst_17 = arith.constant 0.000000e+00 : f32
    %34 = vector.broadcast %cst_17 : f32 to vector<1x128xf32>
    %35 = arith.maximumf %33, %34 : vector<1x128xf32>
    %36 = vector.broadcast %26 : vector<1x128xf32> to vector<16x128xf32>
    %37 = arith.subf %20, %36 : vector<16x128xf32>
    %cst_18 = arith.constant 9.99999974E-6 : f32
    %38 = vector.broadcast %cst_18 : f32 to vector<1x128xf32>
    %39 = arith.addf %35, %38 : vector<1x128xf32>
    %40 = math.rsqrt %39 : vector<1x128xf32>
    %41 = vector.broadcast %40 : vector<1x128xf32> to vector<16x128xf32>
    %42 = arith.mulf %37, %41 : vector<16x128xf32>
    %43 = vector.broadcast %21 : vector<1x128xf32> to vector<16x128xf32>
    %44 = arith.mulf %42, %43 : vector<16x128xf32>
    %45 = vector.broadcast %22 : vector<1x128xf32> to vector<16x128xf32>
    %46 = arith.addf %44, %45 : vector<16x128xf32>
    %cst_19 = arith.constant 0.000000e+00 : f32
    %47 = vector.broadcast %cst_19 : f32 to vector<16x128xf32>
    %48 = arith.maximumf %46, %47 : vector<16x128xf32>
    %49 = arith.truncf %48 : vector<16x128xf32> to vector<16x128xbf16>
    %50 = vector.extract_strided_slice %4 {offsets = [128, 0], sizes = [128, 128], strides = [1, 1]} : vector<256x128xbf16> to vector<128x128xbf16>
    %cst_20 = arith.constant dense<0.000000e+00> : vector<16x128xf32>
    %51 = tpu.matmul %49, %50, %cst_20 {dimension_numbers = #tpu.dot_dimension_numbers<[1], [0], [0], [1], [0, 0, 1, 1], [], []>} : vector<16x128xbf16>, vector<128x128xbf16>, vector<16x128xf32> -> vector<16x128xf32>
    %52 = vector.extract_strided_slice %51 {offsets = [0, 0], sizes = [16, 32], strides = [1, 1]} : vector<16x128xf32> to vector<16x32xf32>
    %53 = arith.truncf %52 : vector<16x32xf32> to vector<16x32xbf16>
    %cst_21 = arith.constant dense<0.000000e+00> : vector<16x32xf32>
    %54 = tpu.matmul %3, %53, %cst_21 {dimension_numbers = #tpu.dot_dimension_numbers<[1], [0], [0], [1], [0, 0, 1, 1], [], []>} : vector<16x16xbf16>, vector<16x32xbf16>, vector<16x32xf32> -> vector<16x32xf32>
    %55 = vector.extract_strided_slice %51 {offsets = [0, 32], sizes = [16, 32], strides = [1, 1]} : vector<16x128xf32> to vector<16x32xf32>
    %56 = arith.addf %54, %55 : vector<16x32xf32>
    %57 = vector.extract_strided_slice %6 {offsets = [4, 0], sizes = [1, 32], strides = [1, 1]} : vector<16x128xf32> to vector<1x32xf32>
    %58 = vector.broadcast %57 : vector<1x32xf32> to vector<16x32xf32>
    %59 = arith.addf %56, %58 : vector<16x32xf32>
    %60 = vector.extract_strided_slice %6 {offsets = [5, 0], sizes = [1, 32], strides = [1, 1]} : vector<16x128xf32> to vector<1x32xf32>
    %61 = vector.extract_strided_slice %6 {offsets = [6, 0], sizes = [1, 32], strides = [1, 1]} : vector<16x128xf32> to vector<1x32xf32>
    %cst_22 = arith.constant dense<0.000000e+00> : vector<32xf32>
    %62 = vector.multi_reduction <add>, %59, %cst_22 [0] : vector<16x32xf32> to vector<32xf32>
    %63 = vector.shape_cast %62 : vector<32xf32> to vector<1x32xf32>
    %cst_23 = arith.constant 6.250000e-02 : f32
    %64 = vector.broadcast %cst_23 : f32 to vector<1x32xf32>
    %65 = arith.mulf %63, %64 : vector<1x32xf32>
    %66 = arith.mulf %59, %59 : vector<16x32xf32>
    %cst_24 = arith.constant dense<0.000000e+00> : vector<32xf32>
    %67 = vector.multi_reduction <add>, %66, %cst_24 [0] : vector<16x32xf32> to vector<32xf32>
    %68 = vector.shape_cast %67 : vector<32xf32> to vector<1x32xf32>
    %cst_25 = arith.constant 6.250000e-02 : f32
    %69 = vector.broadcast %cst_25 : f32 to vector<1x32xf32>
    %70 = arith.mulf %68, %69 : vector<1x32xf32>
    %71 = arith.mulf %65, %65 : vector<1x32xf32>
    %72 = arith.subf %70, %71 : vector<1x32xf32>
    %cst_26 = arith.constant 0.000000e+00 : f32
    %73 = vector.broadcast %cst_26 : f32 to vector<1x32xf32>
    %74 = arith.maximumf %72, %73 : vector<1x32xf32>
    %75 = vector.broadcast %65 : vector<1x32xf32> to vector<16x32xf32>
    %76 = arith.subf %59, %75 : vector<16x32xf32>
    %cst_27 = arith.constant 9.99999974E-6 : f32
    %77 = vector.broadcast %cst_27 : f32 to vector<1x32xf32>
    %78 = arith.addf %74, %77 : vector<1x32xf32>
    %79 = math.rsqrt %78 : vector<1x32xf32>
    %80 = vector.broadcast %79 : vector<1x32xf32> to vector<16x32xf32>
    %81 = arith.mulf %76, %80 : vector<16x32xf32>
    %82 = vector.broadcast %60 : vector<1x32xf32> to vector<16x32xf32>
    %83 = arith.mulf %81, %82 : vector<16x32xf32>
    %84 = vector.broadcast %61 : vector<1x32xf32> to vector<16x32xf32>
    %85 = arith.addf %83, %84 : vector<16x32xf32>
    %cst_28 = arith.constant 0.000000e+00 : f32
    %86 = vector.broadcast %cst_28 : f32 to vector<16x32xf32>
    %87 = arith.maximumf %85, %86 : vector<16x32xf32>
    %c0_29 = arith.constant 0 : index
    %c0_30 = arith.constant 0 : index
    %c0_31 = arith.constant 0 : index
    %88 = vector.load %arg3[%c0_29, %c0_30, %c0_31] : memref<1x2x16xf32, #tpu.memory_space<vmem>>, vector<1x2x16xf32>
    %89 = vector.shape_cast %88 : vector<1x2x16xf32> to vector<2x16xf32>
    %cst_32 = arith.constant dense<0.000000e+00> : vector<2x32xf32>
    %90 = tpu.matmul %89, %87, %cst_32 {dimension_numbers = #tpu.dot_dimension_numbers<[1], [0], [0], [1], [0, 0, 1, 1], [], []>} : vector<2x16xf32>, vector<16x32xf32>, vector<2x32xf32> -> vector<2x32xf32>
    %91 = vector.extract_strided_slice %5 {offsets = [16, 0], sizes = [32, 16], strides = [1, 1]} : vector<64x128xf32> to vector<32x16xf32>
    %cst_33 = arith.constant dense<0.000000e+00> : vector<2x16xf32>
    %92 = tpu.matmul %90, %91, %cst_33 {dimension_numbers = #tpu.dot_dimension_numbers<[1], [0], [0], [1], [0, 0, 1, 1], [], []>} : vector<2x32xf32>, vector<32x16xf32>, vector<2x16xf32> -> vector<2x16xf32>
    %93 = vector.extract_strided_slice %6 {offsets = [7, 0], sizes = [1, 16], strides = [1, 1]} : vector<16x128xf32> to vector<1x16xf32>
    %94 = vector.broadcast %93 : vector<1x16xf32> to vector<2x16xf32>
    %95 = arith.addf %92, %94 : vector<2x16xf32>
    %cst_34 = arith.constant 0.000000e+00 : f32
    %96 = vector.broadcast %cst_34 : f32 to vector<2x16xf32>
    %97 = arith.maximumf %95, %96 : vector<2x16xf32>
    %98 = vector.extract_strided_slice %5 {offsets = [48, 0], sizes = [16, 128], strides = [1, 1]} : vector<64x128xf32> to vector<16x128xf32>
    %cst_35 = arith.constant dense<0.000000e+00> : vector<2x128xf32>
    %99 = tpu.matmul %97, %98, %cst_35 {dimension_numbers = #tpu.dot_dimension_numbers<[1], [0], [0], [1], [0, 0, 1, 1], [], []>} : vector<2x16xf32>, vector<16x128xf32>, vector<2x128xf32> -> vector<2x128xf32>
    %100 = vector.extract_strided_slice %6 {offsets = [8, 0], sizes = [1, 128], strides = [1, 1]} : vector<16x128xf32> to vector<1x128xf32>
    %101 = vector.broadcast %100 : vector<1x128xf32> to vector<2x128xf32>
    %102 = arith.addf %99, %101 : vector<2x128xf32>
    %c0_36 = arith.constant 0 : index
    %c0_37 = arith.constant 0 : index
    %c0_38 = arith.constant 0 : index
    %103 = vector.load %arg7[%c0_36, %c0_37, %c0_38] : memref<1x2x128xf32, #tpu.memory_space<vmem>>, vector<1x2x128xf32>
    %104 = vector.shape_cast %103 : vector<1x2x128xf32> to vector<2x128xf32>
    %105 = vector.shape_cast %102 : vector<2x128xf32> to vector<1x2x128xf32>
    tpu.vector_store %arg7[%c0_36, %c0_37, %c0_38], %105 {strides = array<i32>} : memref<1x2x128xf32, #tpu.memory_space<vmem>>, vector<1x2x128xf32>,
    return
  }
  func.func @transform_0(%arg0: i32) -> (i32, i32, i32) {
    %c0_i32 = arith.constant 0 : i32
    %c0_i32_0 = arith.constant 0 : i32
    %c0_i32_1 = arith.constant 0 : i32
    return %arg0, %c0_i32, %c0_i32_0 : i32, i32, i32
  }
  func.func @transform_1(%arg0: i32) -> (i32, i32, i32) {
    %c0_i32 = arith.constant 0 : i32
    %c0_i32_0 = arith.constant 0 : i32
    %c0_i32_1 = arith.constant 0 : i32
    return %arg0, %c0_i32, %c0_i32_0 : i32, i32, i32
  }
  func.func @transform_2(%arg0: i32) -> (i32, i32, i32) {
    %c0_i32 = arith.constant 0 : i32
    %c0_i32_0 = arith.constant 0 : i32
    %c0_i32_1 = arith.constant 0 : i32
    return %arg0, %c0_i32, %c0_i32_0 : i32, i32, i32
  }
  func.func @transform_3(%arg0: i32) -> (i32, i32) {
    %c0_i32 = arith.constant 0 : i32
    %c0_i32_0 = arith.constant 0 : i32
    %c0_i32_1 = arith.constant 0 : i32
    return %c0_i32, %c0_i32_0 : i32, i32
  }
  func.func @transform_4(%arg0: i32) -> (i32, i32) {
    %c0_i32 = arith.constant 0 : i32
    %c0_i32_0 = arith.constant 0 : i32
    %c0_i32_1 = arith.constant 0 : i32
    return %c0_i32, %c0_i32_0 : i32, i32
  }
  func.func @transform_5(%arg0: i32) -> (i32, i32) {
    %c0_i32 = arith.constant 0 : i32
    %c0_i32_0 = arith.constant 0 : i32
    %c0_i32_1 = arith.constant 0 : i32
    return %c0_i32, %c0_i32_0 : i32, i32
  }
  func.func @transform_6(%arg0: i32) -> (i32, i32, i32) {
    %c0_i32 = arith.constant 0 : i32
    %c0_i32_0 = arith.constant 0 : i32
    %c0_i32_1 = arith.constant 0 : i32
    return %arg0, %c0_i32, %c0_i32_0 : i32, i32, i32
  }
}

</mosaic_0001>

<llo_original>
// kernel: tpu_custom_call.1
$region0: #{tpu_custom_call.1}
  #allocation0 [shape = 'u32[]', space=smem, size = 0x4, offset = 0x4, fixed_abs, tag = 'smem constant byte address 0x4 - core index']
  #allocation1 [shape = 'u32[144,128]{1,0:T(1,128)}', space=vmem, size = 0x12000, scoped, tag = 'internal scratch']
  %s0 = inlined_call_operand.hbm [shape: f32[2,16,16], index: 0, kind: input, shape index: {}]
  %s1 = inlined_call_operand.hbm [shape: bf16[2,16,16], index: 1, kind: input, shape index: {}]
  %s2 = inlined_call_operand.hbm [shape: f32[2,2,16], index: 2, kind: input, shape index: {}]
  %s3 = inlined_call_operand.hbm [shape: bf16[256,128], index: 3, kind: input, shape index: {}]
  %s4 = inlined_call_operand.hbm [shape: f32[64,128], index: 4, kind: input, shape index: {}]
  %s5 = inlined_call_operand.vmem [shape: f32[16,128], index: 5, kind: input, shape index: {}]
  %s6 = inlined_call_operand.hbm [shape: f32[2,2,128], index: 6, kind: output, shape index: {}]
  %s7 = sld [smem:[#allocation0]]
  $region77: #{tpu_custom_call.1} parent=0
    _
  %s9 = ssub.s32 1, %s7
  %s10 = scalar_select 0, %s9, %s7
  $region1: #{tpu_custom_call.1} parent=0
    #allocation2 [shape = 'u8[16384]{0}', space=vmem, size = 0x4000, scoped, tag = 'input window, operand 0']
    #allocation3 [shape = 's32[2]{0}', space=sflag, size = 0x8, scoped, tag = 'scoped memory for tpu_custom_call.1']
    #allocation4 [shape = 's32[2]{0}', space=sflag, size = 0x8, scoped, tag = 'scoped memory for tpu_custom_call.1']
    #allocation5 [shape = 'u8[8192]{0}', space=vmem, size = 0x2000, scoped, tag = 'input window, operand 1']
    #allocation6 [shape = 's32[2]{0}', space=sflag, size = 0x8, scoped, tag = 'scoped memory for tpu_custom_call.1']
    #allocation7 [shape = 'u8[2048]{0}', space=vmem, size = 0x800, scoped, tag = 'input window, operand 2']
    #allocation8 [shape = 'u8[65536]{0}', space=vmem, size = 0x10000, scoped, tag = 'input window, operand 3, single buffered']
    #allocation9 [shape = 's32[1]{0}', space=sflag, size = 0x4, scoped, tag = 'scoped memory for tpu_custom_call.1']
    #allocation10 [shape = 'u8[32768]{0}', space=vmem, size = 0x8000, scoped, tag = 'input window, operand 4, single buffered']
    #allocation11 [shape = 'u8[2048]{0}', space=vmem, size = 0x800, scoped, tag = 'output window, operand 0']
    %11 = vsyncpa [#allocation3], 0
    %s12 = scalar_lea.sflag [#allocation3], 1
    %13 = vsyncpa %s12, 0
    %14 = vsyncpa [#allocation6], 0
    %s15 = scalar_lea.sflag [#allocation6], 1
    %16 = vsyncpa %s15, 0
    %17 = vsyncpa [#allocation9], 0
    %18 = vsyncpa [#allocation4], 0
    %s19 = scalar_lea.sflag [#allocation4], 1
    %20 = vsyncpa %s19, 0
    loop: start=0, step=1, limit=4
    $region2: #{tpu_custom_call.1} parent=1 // loop_pre_header
      _
    $region3: #{tpu_custom_call.1} parent=1 // loop_header
      %s22 = sphi 0, %s26
      %p23 = scmp.ge.s32.totalorder %s22, 4
      %s32 = sphi 0, %s34
      %s35 = sphi 0, %s32
      %s36 = sphi 0, %s35
      %s52 = sphi 0, %s36
      %s58 = sphi 0, %s60
      %s61 = sphi 0, %s58
      %s62 = sphi 0, %s61
      %s78 = sphi 0, %s62
      %s84 = sphi 0, %s86
      %s87 = sphi 0, %s84
      %s88 = sphi 0, %s87
      %s104 = sphi 0, %s88
      %s108 = sphi 0, %s108
      %s110 = sphi 0, %s108
      %s111 = sphi 0, %s110
      %s125 = sphi 0, %s111
      %s129 = sphi 0, %s129
      %s131 = sphi 0, %s129
      %s132 = sphi 0, %s131
      %s146 = sphi 0, %s132
      %s150 = sphi 0, %s150
      %s152 = sphi 0, %s150
      %s153 = sphi 0, %s152
      %s167 = sphi 0, %s153
      %s173 = sphi 0, %s175
      %s176 = sphi 0, %s173
      %s177 = sphi 0, %s176
      %s193 = sphi 0, %s177
    $region4: #{tpu_custom_call.1} parent=1 // loop_header_branch
      %25 = sbr.rel (%p23) target = $region8
    $region5: #{tpu_custom_call.1} parent=1 // loop_body
      %s27 = ssub.s32 %s22, 1
      %s28 = ssub.s32 %s22, 2
      %s29 = sadd.s32 %s22, 1
      %s30 = ssub.s32 %s22, %s29
      %p31 = scmp.eq.s32.totalorder %s30, 0
      %s33 = sadd.s32 %s32, 1
      %s34 = scalar_select %p31, %s32, %s33
      %p37 = pneg %p31
      %p38 = scmp.eq.s32.totalorder %s22, 1
      %p39 = por %p37, %p38
      %p40 = scmp.ne.s32.totalorder %s32, %s35
      %p41 = scmp.eq.s32.totalorder %s22, 0
      %p42 = por %p40, %p41
      %p43 = scmp.ne.s32.totalorder %s32, %s35
      %p44 = scmp.eq.s32.totalorder %s27, 1
      %p45 = por %p43, %p44
      %p46 = scmp.ne.s32.totalorder %s35, %s36
      %p47 = scmp.eq.s32.totalorder %s27, 0
      %p48 = por %p46, %p47
      %p49 = scmp.ne.s32.totalorder %s35, %s36
      %p50 = scmp.eq.s32.totalorder %s28, 1
      %p51 = por %p49, %p50
      %p53 = scmp.ne.s32.totalorder %s36, %s52
      %p54 = scmp.eq.s32.totalorder %s28, 0
      %p55 = por %p53, %p54
      %s56 = ssub.s32 %s22, %s29
      %p57 = scmp.eq.s32.totalorder %s56, 0
      %s59 = sadd.s32 %s58, 1
      %s60 = scalar_select %p57, %s58, %s59
      %p63 = pneg %p57
      %p64 = scmp.eq.s32.totalorder %s22, 1
      %p65 = por %p63, %p64
      %p66 = scmp.ne.s32.totalorder %s58, %s61
      %p67 = scmp.eq.s32.totalorder %s22, 0
      %p68 = por %p66, %p67
      %p69 = scmp.ne.s32.totalorder %s58, %s61
      %p70 = scmp.eq.s32.totalorder %s27, 1
      %p71 = por %p69, %p70
      %p72 = scmp.ne.s32.totalorder %s61, %s62
      %p73 = scmp.eq.s32.totalorder %s27, 0
      %p74 = por %p72, %p73
      %p75 = scmp.ne.s32.totalorder %s61, %s62
      %p76 = scmp.eq.s32.totalorder %s28, 1
      %p77 = por %p75, %p76
      %p79 = scmp.ne.s32.totalorder %s62, %s78
      %p80 = scmp.eq.s32.totalorder %s28, 0
      %p81 = por %p79, %p80
      %s82 = ssub.s32 %s22, %s29
      %p83 = scmp.eq.s32.totalorder %s82, 0
      %s85 = sadd.s32 %s84, 1
      %s86 = scalar_select %p83, %s84, %s85
      %p89 = pneg %p83
      %p90 = scmp.eq.s32.totalorder %s22, 1
      %p91 = por %p89, %p90
      %p92 = scmp.ne.s32.totalorder %s84, %s87
      %p93 = scmp.eq.s32.totalorder %s22, 0
      %p94 = por %p92, %p93
      %p95 = scmp.ne.s32.totalorder %s84, %s87
      %p96 = scmp.eq.s32.totalorder %s27, 1
      %p97 = por %p95, %p96
      %p98 = scmp.ne.s32.totalorder %s87, %s88
      %p99 = scmp.eq.s32.totalorder %s27, 0
      %p100 = por %p98, %p99
      %p101 = scmp.ne.s32.totalorder %s87, %s88
      %p102 = scmp.eq.s32.totalorder %s28, 1
      %p103 = por %p101, %p102
      %p105 = scmp.ne.s32.totalorder %s88, %s104
      %p106 = scmp.eq.s32.totalorder %s28, 0
      %p107 = por %p105, %p106
      %s109 = sadd.s32 %s108, 1
      %p112 = scmp.eq.s32.totalorder %s22, 1
      %p113 = scmp.ne.s32.totalorder %s108, %s110
      %p114 = scmp.eq.s32.totalorder %s22, 0
      %p115 = por %p113, %p114
      %p116 = scmp.ne.s32.totalorder %s108, %s110
      %p117 = scmp.eq.s32.totalorder %s27, 1
      %p118 = por %p116, %p117
      %p119 = scmp.ne.s32.totalorder %s110, %s111
      %p120 = scmp.eq.s32.totalorder %s27, 0
      %p121 = por %p119, %p120
      %p122 = scmp.ne.s32.totalorder %s110, %s111
      %p123 = scmp.eq.s32.totalorder %s28, 1
      %p124 = por %p122, %p123
      %p126 = scmp.ne.s32.totalorder %s111, %s125
      %p127 = scmp.eq.s32.totalorder %s28, 0
      %p128 = por %p126, %p127
      %s130 = sadd.s32 %s129, 1
      %p133 = scmp.eq.s32.totalorder %s22, 1
      %p134 = scmp.ne.s32.totalorder %s129, %s131
      %p135 = scmp.eq.s32.totalorder %s22, 0
      %p136 = por %p134, %p135
      %p137 = scmp.ne.s32.totalorder %s129, %s131
      %p138 = scmp.eq.s32.totalorder %s27, 1
      %p139 = por %p137, %p138
      %p140 = scmp.ne.s32.totalorder %s131, %s132
      %p141 = scmp.eq.s32.totalorder %s27, 0
      %p142 = por %p140, %p141
      %p143 = scmp.ne.s32.totalorder %s131, %s132
      %p144 = scmp.eq.s32.totalorder %s28, 1
      %p145 = por %p143, %p144
      %p147 = scmp.ne.s32.totalorder %s132, %s146
      %p148 = scmp.eq.s32.totalorder %s28, 0
      %p149 = por %p147, %p148
      %s151 = sadd.s32 %s150, 1
      %p154 = scmp.eq.s32.totalorder %s22, 1
      %p155 = scmp.ne.s32.totalorder %s150, %s152
      %p156 = scmp.eq.s32.totalorder %s22, 0
      %p157 = por %p155, %p156
      %p158 = scmp.ne.s32.totalorder %s150, %s152
      %p159 = scmp.eq.s32.totalorder %s27, 1
      %p160 = por %p158, %p159
      %p161 = scmp.ne.s32.totalorder %s152, %s153
      %p162 = scmp.eq.s32.totalorder %s27, 0
      %p163 = por %p161, %p162
      %p164 = scmp.ne.s32.totalorder %s152, %s153
      %p165 = scmp.eq.s32.totalorder %s28, 1
      %p166 = por %p164, %p165
      %p168 = scmp.ne.s32.totalorder %s153, %s167
      %p169 = scmp.eq.s32.totalorder %s28, 0
      %p170 = por %p168, %p169
      %s171 = ssub.s32 %s22, %s29
      %p172 = scmp.eq.s32.totalorder %s171, 0
      %s174 = sadd.s32 %s173, 1
      %s175 = scalar_select %p172, %s173, %s174
      %p178 = pneg %p172
      %p179 = scmp.eq.s32.totalorder %s22, 1
      %p180 = por %p178, %p179
      %p181 = scmp.ne.s32.totalorder %s173, %s176
      %p182 = scmp.eq.s32.totalorder %s22, 0
      %p183 = por %p181, %p182
      %p184 = scmp.ne.s32.totalorder %s173, %s176
      %p185 = scmp.eq.s32.totalorder %s27, 1
      %p186 = por %p184, %p185
      %p187 = scmp.ne.s32.totalorder %s176, %s177
      %p188 = scmp.eq.s32.totalorder %s27, 0
      %p189 = por %p187, %p188
      %p190 = scmp.ne.s32.totalorder %s176, %s177
      %p191 = scmp.eq.s32.totalorder %s28, 1
      %p192 = por %p190, %p191
      %p194 = scmp.ne.s32.totalorder %s177, %s193
      %p195 = scmp.eq.s32.totalorder %s28, 0
      %p196 = por %p194, %p195
      %p197 = scmp.le.s32.totalorder 1, %s22
      %p198 = scmp.lt.s32.totalorder %s22, 3
      %p199 = pnand %p197, %p198
      %p200 = pneg %p199
      // Predicated region
      $region9: #{tpu_custom_call.1} parent=5 // pred_check
        _
      $region10: #{tpu_custom_call.1} parent=5 // pred_check_branch
        %202 = sbr.rel (%p199) target = $region12
      $region11: #{tpu_custom_call.1} parent=5 // pred_region
        %s203 = ssub.s32 %s22, 1
        // Predicated region
        $region13: #{tpu_custom_call.1} parent=11 // pred_check
          %p204 = pneg %p121
        $region14: #{tpu_custom_call.1} parent=11 // pred_check_branch
          %206 = sbr.rel (%p204) target = $region16
        $region15: #{tpu_custom_call.1} parent=11 // pred_region
          %s208 = ssub.s32 2048, 2048
          %209 = vsyncadd [#allocation9], %s208
          %s210 = sshll.u32 [#allocation8], 4
          %s211 = int_to_ptr.vmem [resolvable:$true] %s210
          %216 = dma.hbm_to_vmem [thread:$0]  %s3, 2048, %s211, [#allocation9], 64, 64, 4
        $region16: #{tpu_custom_call.1} parent=11 // pred_fallthru
          _
        // Predicated region
        $region17: #{tpu_custom_call.1} parent=11 // pred_check
          %p217 = pneg %p142
        $region18: #{tpu_custom_call.1} parent=11 // pred_check_branch
          %219 = sbr.rel (%p217) target = $region20
        $region19: #{tpu_custom_call.1} parent=11 // pred_region
          %s221 = ssub.s32 1024, 1024
          %222 = vsyncadd [#allocation9], %s221
          %s223 = sshll.u32 [#allocation10], 4
          %s224 = int_to_ptr.vmem [resolvable:$true] %s223
          %229 = dma.hbm_to_vmem [thread:$0]  %s4, 1024, %s224, [#allocation9], 128, 128, 8
        $region20: #{tpu_custom_call.1} parent=11 // pred_fallthru
          _
        // Predicated region
        $region21: #{tpu_custom_call.1} parent=11 // pred_check
          %p230 = pneg %p163
        $region22: #{tpu_custom_call.1} parent=11 // pred_check_branch
          %232 = sbr.rel (%p230) target = $region24
        $region23: #{tpu_custom_call.1} parent=11 // pred_region
          _
        $region24: #{tpu_custom_call.1} parent=11 // pred_fallthru
          _
      $region12: #{tpu_custom_call.1} parent=5 // pred_fallthru
        _
      %p233 = scmp.lt.s32.totalorder %s22, 2
      // Predicated region
      $region25: #{tpu_custom_call.1} parent=5 // pred_check
        %p234 = pneg %p233
      $region26: #{tpu_custom_call.1} parent=5 // pred_check_branch
        %236 = sbr.rel (%p234) target = $region28
      $region27: #{tpu_custom_call.1} parent=5 // pred_region
        // Predicated region
        $region29: #{tpu_custom_call.1} parent=27 // pred_check
          %p237 = pneg %p42
        $region30: #{tpu_custom_call.1} parent=27 // pred_check_branch
          %239 = sbr.rel (%p237) target = $region32
        $region31: #{tpu_custom_call.1} parent=27 // pred_region
          %s240 = sand.u32 %s32, 1
          %s241 = scalar_lea.sflag [#allocation3], %s240
          %s242 = sand.u32 %s32, 1
          %s243 = smul.addr %s242, 16
          %s244 = scalar_lea.vmem [#allocation2], %s243
          %s246 = ssub.s32 256, 256
          %247 = vsyncadd %s241, %s246
          %s248 = smul.addr %s22, 2
          %s249 = smul.addr %s248, 128
          %s250 = scalar_lea.hbm %s0, %s249
          %s251 = sshll.u32 %s244, 4
          %s252 = int_to_ptr.vmem [resolvable:$true] %s251
          %257 = dma.hbm_to_vmem [thread:$0]  %s250, 256, %s252, %s241, 128, 128, 8
        $region32: #{tpu_custom_call.1} parent=27 // pred_fallthru
          _
        // Predicated region
        $region33: #{tpu_custom_call.1} parent=27 // pred_check
          %p258 = pneg %p68
        $region34: #{tpu_custom_call.1} parent=27 // pred_check_branch
          %260 = sbr.rel (%p258) target = $region36
        $region35: #{tpu_custom_call.1} parent=27 // pred_region
          %s261 = sand.u32 %s22, 1
          %s262 = scalar_lea.sflag [#allocation6], %s261
          %s263 = sand.u32 %s58, 1
          %s264 = smul.addr %s263, 8
          %s265 = scalar_lea.vmem [#allocation5], %s264
          %s267 = ssub.s32 128, 128
          %268 = vsyncadd %s262, %s267
          %s269 = smul.addr %s22, 2
          %s270 = smul.addr %s269, 64
          %s271 = scalar_lea.hbm %s1, %s270
          %s272 = sshll.u32 %s265, 4
          %s273 = int_to_ptr.vmem [resolvable:$true] %s272
          %278 = dma.hbm_to_vmem [thread:$0]  %s271, 128, %s273, %s262, 64, 64, 4
        $region36: #{tpu_custom_call.1} parent=27 // pred_fallthru
          _
        // Predicated region
        $region37: #{tpu_custom_call.1} parent=27 // pred_check
          %p279 = pneg %p94
        $region38: #{tpu_custom_call.1} parent=27 // pred_check_branch
          %281 = sbr.rel (%p279) target = $region40
        $region39: #{tpu_custom_call.1} parent=27 // pred_region
          %s282 = sand.u32 %s22, 1
          %s283 = scalar_lea.sflag [#allocation6], %s282
          %s284 = sand.u32 %s84, 1
          %s285 = smul.addr %s284, 2
          %s286 = scalar_lea.vmem [#allocation7], %s285
          %s288 = ssub.s32 32, 32
          %289 = vsyncadd %s283, %s288
          %s290 = smul.addr %s22, 32
          %s291 = scalar_lea.hbm %s2, %s290
          %s293 = sshll.u32 %s286, 4
          %s294 = int_to_ptr.vmem [resolvable:$true] %s293
          %296 = dma.hbm_to_vmem [thread:$0]  %s291, 32, %s294, %s283
        $region40: #{tpu_custom_call.1} parent=27 // pred_fallthru
          _
      $region28: #{tpu_custom_call.1} parent=5 // pred_fallthru
        _
      %p297 = scmp.le.s32.totalorder 1, %s22
      %p298 = scmp.lt.s32.totalorder %s22, 3
      %p299 = pnand %p297, %p298
      %p300 = pneg %p299
      // Predicated region
      $region41: #{tpu_custom_call.1} parent=5 // pred_check
        _
      $region42: #{tpu_custom_call.1} parent=5 // pred_check_branch
        %302 = sbr.rel (%p299) target = $region44
      $region43: #{tpu_custom_call.1} parent=5 // pred_region
        %s303 = ssub.s32 %s22, 1
        %s304 = sand.u32 %s35, 1
        %s305 = scalar_lea.sflag [#allocation3], %s304
        %s306 = sand.u32 %s35, 1
        %s307 = smul.addr %s306, 16
        %s308 = scalar_lea.vmem [#allocation2], %s307
        // Predicated region
        $region45: #{tpu_custom_call.1} parent=43 // pred_check
          %p309 = pneg %p48
        $region46: #{tpu_custom_call.1} parent=43 // pred_check_branch
          %311 = sbr.rel (%p309) target = $region48
        $region47: #{tpu_custom_call.1} parent=43 // pred_region
          %312 = dma.done %s305, 256
        $region48: #{tpu_custom_call.1} parent=43 // pred_fallthru
          _
        %s313 = sand.u32 %s27, 1
        %s314 = scalar_lea.sflag [#allocation6], %s313
        %s315 = sand.u32 %s61, 1
        %s316 = smul.addr %s315, 8
        %s317 = scalar_lea.vmem [#allocation5], %s316
        // Predicated region
        $region49: #{tpu_custom_call.1} parent=43 // pred_check
          %p318 = pneg %p74
        $region50: #{tpu_custom_call.1} parent=43 // pred_check_branch
          %320 = sbr.rel (%p318) target = $region52
        $region51: #{tpu_custom_call.1} parent=43 // pred_region
          %321 = dma.done %s314, 128
        $region52: #{tpu_custom_call.1} parent=43 // pred_fallthru
          _
        %s322 = sand.u32 %s27, 1
        %s323 = scalar_lea.sflag [#allocation6], %s322
        %s324 = sand.u32 %s87, 1
        %s325 = smul.addr %s324, 2
        %s326 = scalar_lea.vmem [#allocation7], %s325
        // Predicated region
        $region53: #{tpu_custom_call.1} parent=43 // pred_check
          %p327 = pneg %p100
        $region54: #{tpu_custom_call.1} parent=43 // pred_check_branch
          %329 = sbr.rel (%p327) target = $region56
        $region55: #{tpu_custom_call.1} parent=43 // pred_region
          %330 = dma.done %s323, 32
        $region56: #{tpu_custom_call.1} parent=43 // pred_fallthru
          _
        // Predicated region
        $region57: #{tpu_custom_call.1} parent=43 // pred_check
          %p331 = pneg %p121
        $region58: #{tpu_custom_call.1} parent=43 // pred_check_branch
          %333 = sbr.rel (%p331) target = $region60
        $region59: #{tpu_custom_call.1} parent=43 // pred_region
          %334 = dma.done [#allocation9], 2048
        $region60: #{tpu_custom_call.1} parent=43 // pred_fallthru
          _
        // Predicated region
        $region61: #{tpu_custom_call.1} parent=43 // pred_check
          %p335 = pneg %p142
        $region62: #{tpu_custom_call.1} parent=43 // pred_check_branch
          %337 = sbr.rel (%p335) target = $region64
        $region63: #{tpu_custom_call.1} parent=43 // pred_region
          %338 = dma.done [#allocation9], 1024
        $region64: #{tpu_custom_call.1} parent=43 // pred_fallthru
          _
        %s339 = sand.u32 %s35, 1
        %s340 = scalar_lea.sflag [#allocation3], %s339
        %s341 = sand.u32 %s35, 1
        %s342 = smul.addr %s341, 16
        %s343 = scalar_lea.vmem [#allocation2], %s342
        %p344 = pneg %p48
        %p345 = pneg %p45
        %s346 = sand.u32 %s27, 1
        %s347 = scalar_lea.sflag [#allocation6], %s346
        %s348 = sand.u32 %s61, 1
        %s349 = smul.addr %s348, 8
        %s350 = scalar_lea.vmem [#allocation5], %s349
        %p351 = pneg %p74
        %p352 = pneg %p71
        %s353 = sand.u32 %s27, 1
        %s354 = scalar_lea.sflag [#allocation6], %s353
        %s355 = sand.u32 %s87, 1
        %s356 = smul.addr %s355, 2
        %s357 = scalar_lea.vmem [#allocation7], %s356
        %p358 = pneg %p100
        %p359 = pneg %p97
        %p360 = pneg %p121
        %p361 = pneg %p118
        %p362 = pneg %p142
        %p363 = pneg %p139
        %p364 = pneg %p163
        %p365 = pneg %p160
        %p366 = pneg %p189
        %p367 = pneg %p186
        %s368 = sand.u32 %s176, 1
        %s369 = scalar_lea.sflag [#allocation4], %s368
        %s370 = sand.u32 %s176, 1
        %s371 = smul.addr %s370, 2
        %s372 = scalar_lea.vmem [#allocation11], %s371
        %v374 = vld [vmem:[%s308] sm:$0xff]
        %v375 = vld [vmem:[%s308 + $0x8] sm:$0xff]
        %v376 = vld [vmem:[%s317] sm:$0xf]
        %v377 = vld [vmem:[%s317 + $0x4] sm:$0xf]
        %v378 = vld [vmem:[#allocation8] sm:$0xf]
        %v379 = vld [vmem:[#allocation8 + $0x4] sm:$0xf]
        %v380 = vld [vmem:[#allocation8 + $0x8] sm:$0xf]
        %v381 = vld [vmem:[#allocation8 + $0xc] sm:$0xf]
        %v382 = vld [vmem:[#allocation8 + $0x10] sm:$0xf]
        %v383 = vld [vmem:[#allocation8 + $0x14] sm:$0xf]
        %v384 = vld [vmem:[#allocation8 + $0x18] sm:$0xf]
        %v385 = vld [vmem:[#allocation8 + $0x1c] sm:$0xf]
        %v386 = vld [vmem:[#allocation8 + $0x20] sm:$0xf]
        %v387 = vld [vmem:[#allocation8 + $0x24] sm:$0xf]
        %v388 = vld [vmem:[#allocation8 + $0x28] sm:$0xf]
        %v389 = vld [vmem:[#allocation8 + $0x2c] sm:$0xf]
        %v390 = vld [vmem:[#allocation8 + $0x30] sm:$0xf]
        %v391 = vld [vmem:[#allocation8 + $0x34] sm:$0xf]
        %v392 = vld [vmem:[#allocation8 + $0x38] sm:$0xf]
        %v393 = vld [vmem:[#allocation8 + $0x3c] sm:$0xf]
        %v394 = vld [vmem:[#allocation8 + $0x40] sm:$0xf]
        %v395 = vld [vmem:[#allocation8 + $0x44] sm:$0xf]
        %v396 = vld [vmem:[#allocation8 + $0x48] sm:$0xf]
        %v397 = vld [vmem:[#allocation8 + $0x4c] sm:$0xf]
        %v398 = vld [vmem:[#allocation8 + $0x50] sm:$0xf]
        %v399 = vld [vmem:[#allocation8 + $0x54] sm:$0xf]
        %v400 = vld [vmem:[#allocation8 + $0x58] sm:$0xf]
        %v401 = vld [vmem:[#allocation8 + $0x5c] sm:$0xf]
        %v402 = vld [vmem:[#allocation8 + $0x60] sm:$0xf]
        %v403 = vld [vmem:[#allocation8 + $0x64] sm:$0xf]
        %v404 = vld [vmem:[#allocation8 + $0x68] sm:$0xf]
        %v405 = vld [vmem:[#allocation8 + $0x6c] sm:$0xf]
        %v406 = vld [vmem:[#allocation8 + $0x70] sm:$0xf]
        %v407 = vld [vmem:[#allocation8 + $0x74] sm:$0xf]
        %v408 = vld [vmem:[#allocation8 + $0x78] sm:$0xf]
        %v409 = vld [vmem:[#allocation8 + $0x7c] sm:$0xf]
        %v410 = vld [vmem:[#allocation10] sm:$0xff]
        %v411 = vld [vmem:[#allocation10 + $0x8] sm:$0xff]
        %v412 = vld [vmem:[#allocation10 + $0x10] sm:$0xff]
        %v413 = vld [vmem:[#allocation10 + $0x18] sm:$0xff]
        %v414 = vld [vmem:[#allocation10 + $0x20] sm:$0xff]
        %v415 = vld [vmem:[#allocation10 + $0x28] sm:$0xff]
        %v416 = vld [vmem:[#allocation10 + $0x30] sm:$0xff]
        %v417 = vld [vmem:[#allocation10 + $0x38] sm:$0xff]
        %v418 = vld [vmem:[%s5] sm:$0xff]
        %v419 = vld [vmem:[%s5 + $0x8] sm:$0xff]
        %v420 = vlaneseq
        %v421 = vshrl.u32 %v420, 7
        %v422 = vsub.s32 0, %v421
        %v423 = vrot.slane %v418, %v422
        %vm424 = vcmask 130048
        %v426 = vsel %vm424, %v374, 0
        %v429 = vsel %vm424, %v375, 0
        %431 = vmatprep.subr.mxu0 0.0
        %432 = vmatpush1.msra.mxu0 %v410
        %433 = vmatprep.subr.mxu0 0.0
        %434 = vmatpush1.msra.mxu0 %v411
        %435 = vmatprep.subr.mxu0 0.0
        %436 = vmatpush1.msra.mxu0 0.0
        %437 = vmatprep.subr.mxu0 0.0
        %438 = vmatpush1.msra.mxu0 0.0
        %439 = vmatprep.subr.mxu0 0.0
        %440 = vmatpush1.msra.mxu0 0.0
        %441 = vmatprep.subr.mxu0 0.0
        %442 = vmatpush1.msra.mxu0 0.0
        %443 = vmatprep.subr.mxu0 0.0
        %444 = vmatpush1.msra.mxu0 0.0
        %445 = vmatprep.subr.mxu0 0.0
        %446 = vmatpush1.msra.mxu0 0.0
        %447 = vmatprep.subr.mxu0 0.0
        %448 = vmatpush1.msra.mxu0 0.0
        %449 = vmatprep.subr.mxu0 0.0
        %450 = vmatpush1.msra.mxu0 0.0
        %451 = vmatprep.subr.mxu0 0.0
        %452 = vmatpush1.msra.mxu0 0.0
        %453 = vmatprep.subr.mxu0 0.0
        %454 = vmatpush1.msra.mxu0 0.0
        %455 = vmatprep.subr.mxu0 0.0
        %456 = vmatpush1.msra.mxu0 0.0
        %457 = vmatprep.subr.mxu0 0.0
        %458 = vmatpush1.msra.mxu0 0.0
        %459 = vmatprep.subr.mxu0 0.0
        %460 = vmatpush1.msra.mxu0 0.0
        %461 = vmatprep.subr.mxu0 0.0
        %462 = vmatpush1.msra.mxu0 0.0
        %463 = vmatprep.subr.mxu0 0.0
        %464 = vmatpush1.msra.mxu0 0.0
        %465 = vmatprep.subr.mxu0 0.0
        %466 = vmatpush1.msra.mxu0 0.0
        %467 = vmatprep.subr.mxu0 0.0
        %468 = vmatpush1.msra.mxu0 0.0
        %469 = vmatprep.subr.mxu0 0.0
        %470 = vmatpush1.msra.mxu0 0.0
        %471 = vmatprep.subr.mxu0 0.0
        %472 = vmatpush1.msra.mxu0 0.0
        %473 = vmatprep.subr.mxu0 0.0
        %474 = vmatpush1.msra.mxu0 0.0
        %475 = vmatprep.subr.mxu0 0.0
        %476 = vmatpush1.msra.mxu0 0.0
        %477 = vmatprep.subr.mxu0 0.0
        %478 = vmatpush1.msra.mxu0 0.0
        %479 = vmatprep.subr.mxu0 0.0
        %480 = vmatpush1.msra.mxu0 0.0
        %481 = vmatprep.subr.mxu0 0.0
        %482 = vmatpush1.msra.mxu0 0.0
        %483 = vmatprep.subr.mxu0 0.0
        %484 = vmatpush1.msra.mxu0 0.0
        %485 = vmatprep.subr.mxu0 0.0
        %486 = vmatpush1.msra.mxu0 0.0
        %487 = vmatprep.subr.mxu0 0.0
        %488 = vmatpush1.msra.mxu0 0.0
        %489 = vmatprep.subr.mxu0 0.0
        %490 = vmatpush1.msra.mxu0 0.0
        %491 = vmatprep.subr.mxu0 0.0
        %492 = vmatpush1.msra.mxu0 0.0
        %493 = vmatprep.subr.mxu0 0.0
        %494 = vmatpush1.msra.mxu0 0.0
        %495 = vmatprep.mubr.f32.mxu0 0.0
        %496 = vmatmul.mubr.f32.gmra.mrb[0].mxu0 %v426
        %v497 = vpop.f32.mrb[0].mxu0
        %v498 = vadd.f32 %v423, %v497
        %v499 = vpop.f32.mrb[0].mxu0
        %500 = vmatprep.mubr.f32.mxu0 0.0
        %501 = vmatmul.mubr.f32.gmra.mrb[0].mxu0 %v429
        %v502 = vpop.f32.mrb[0].mxu0
        %v503 = vadd.f32 %v423, %v502
        %v504 = vpop.f32.mrb[0].mxu0
        %505 = vdwg.mxu0
        %v506 = vpack.c.bf16 %v503, %v498
        %v509 = vunpack.c.l.b16 %v376
        %v510 = vunpack.c.l.b16 %v377
        %v511 = vpack.c.b16 %v510, %v509
        %v513 = vsel %vm424, %v511, 0
        %515 = vmatprep.subr.bf16.mxu0 0
        %516 = vmatpush1.bf16.msra.mxu0 %v506
        %517 = vmatprep.subr.bf16.mxu0 0
        %518 = vmatpush1.bf16.msra.mxu0 0
        %519 = vmatprep.subr.bf16.mxu0 0
        %520 = vmatpush1.bf16.msra.mxu0 0
        %521 = vmatprep.subr.bf16.mxu0 0
        %522 = vmatpush1.bf16.msra.mxu0 0
        %523 = vmatprep.subr.bf16.mxu0 0
        %524 = vmatpush1.bf16.msra.mxu0 0
        %525 = vmatprep.subr.bf16.mxu0 0
        %526 = vmatpush1.bf16.msra.mxu0 0
        %527 = vmatprep.subr.bf16.mxu0 0
        %528 = vmatpush1.bf16.msra.mxu0 0
        %529 = vmatprep.subr.bf16.mxu0 0
        %530 = vmatpush1.bf16.msra.mxu0 0
        %531 = vmatprep.subr.bf16.mxu0 0
        %532 = vmatpush1.bf16.msra.mxu0 0
        %533 = vmatprep.subr.bf16.mxu0 0
        %534 = vmatpush1.bf16.msra.mxu0 0
        %535 = vmatprep.subr.bf16.mxu0 0
        %536 = vmatpush1.bf16.msra.mxu0 0
        %537 = vmatprep.subr.bf16.mxu0 0
        %538 = vmatpush1.bf16.msra.mxu0 0
        %539 = vmatprep.subr.bf16.mxu0 0
        %540 = vmatpush1.bf16.msra.mxu0 0
        %541 = vmatprep.subr.bf16.mxu0 0
        %542 = vmatpush1.bf16.msra.mxu0 0
        %543 = vmatprep.subr.bf16.mxu0 0
        %544 = vmatpush1.bf16.msra.mxu0 0
        %545 = vmatprep.subr.bf16.mxu0 0
        %546 = vmatpush1.bf16.msra.mxu0 0
        %547 = vmatprep.mubr.bf16.mxu0 0
        %548 = vmatmul.mubr.bf16.gmra.mrb[0].mxu0 %v513
        %v549 = vpop.f32.mrb[0].mxu0
        %v550 = vadd.f32 0.0, %v549
        %v551 = vpop.f32.mrb[0].mxu0
        %v552 = vpop.f32.mrb[0].mxu0
        %v553 = vadd.f32 0.0, %v552
        %v554 = vpop.f32.mrb[0].mxu0
        %555 = vdwg.mxu0
        %558 = vrot.lane.b32.xlu0 %v498, 64
        %v559 = vpop.permute.xlu0 %558
        %560 = vrot.lane.b32.xlu0 %v503, 64
        %v561 = vpop.permute.xlu0 %560
        %vm564 = vcmask 523264
        %v565 = vsel %vm564, %v550, %v559
        %v566 = vsel %vm564, %v553, %v561
        %v567 = vpack.c.bf16 %v566, %v565
        %v568 = vlaneseq
        %v569 = vshrl.u32 %v568, 7
        %v570 = vsub.s32 1, %v569
        %v571 = vrot.slane %v418, %v570
        %v588 = vunpack.c.l.b16 %v378
        %v589 = vunpack.c.l.b16 %v379
        %v590 = vunpack.c.l.b16 %v380
        %v591 = vunpack.c.l.b16 %v381
        %v592 = vunpack.c.l.b16 %v382
        %v593 = vunpack.c.l.b16 %v383
        %v594 = vunpack.c.l.b16 %v384
        %v595 = vunpack.c.l.b16 %v385
        %v596 = vunpack.c.l.b16 %v386
        %v597 = vunpack.c.l.b16 %v387
        %v598 = vunpack.c.l.b16 %v388
        %v599 = vunpack.c.l.b16 %v389
        %v600 = vunpack.c.l.b16 %v390
        %v601 = vunpack.c.l.b16 %v391
        %v602 = vunpack.c.l.b16 %v392
        %v603 = vunpack.c.l.b16 %v393
        %v604 = vpack.c.b16 %v589, %v588
        %v605 = vpack.c.b16 %v591, %v590
        %v606 = vpack.c.b16 %v593, %v592
        %v607 = vpack.c.b16 %v595, %v594
        %v608 = vpack.c.b16 %v597, %v596
        %v609 = vpack.c.b16 %v599, %v598
        %v610 = vpack.c.b16 %v601, %v600
        %v611 = vpack.c.b16 %v603, %v602
        %620 = vmatprep.subr.bf16.mxu0 0
        %621 = vmatpush1.bf16.msra.mxu0 %v604
        %622 = vmatprep.subr.bf16.mxu0 0
        %623 = vmatpush1.bf16.msra.mxu0 %v605
        %624 = vmatprep.subr.bf16.mxu0 0
        %625 = vmatpush1.bf16.msra.mxu0 %v606
        %626 = vmatprep.subr.bf16.mxu0 0
        %627 = vmatpush1.bf16.msra.mxu0 %v607
        %628 = vmatprep.subr.bf16.mxu0 0
        %629 = vmatpush1.bf16.msra.mxu0 %v608
        %630 = vmatprep.subr.bf16.mxu0 0
        %631 = vmatpush1.bf16.msra.mxu0 %v609
        %632 = vmatprep.subr.bf16.mxu0 0
        %633 = vmatpush1.bf16.msra.mxu0 %v610
        %634 = vmatprep.subr.bf16.mxu0 0
        %635 = vmatpush1.bf16.msra.mxu0 %v611
        %636 = vmatprep.subr.bf16.mxu0 0
        %637 = vmatpush1.bf16.msra.mxu0 0
        %638 = vmatprep.subr.bf16.mxu0 0
        %639 = vmatpush1.bf16.msra.mxu0 0
        %640 = vmatprep.subr.bf16.mxu0 0
        %641 = vmatpush1.bf16.msra.mxu0 0
        %642 = vmatprep.subr.bf16.mxu0 0
        %643 = vmatpush1.bf16.msra.mxu0 0
        %644 = vmatprep.subr.bf16.mxu0 0
        %645 = vmatpush1.bf16.msra.mxu0 0
        %646 = vmatprep.subr.bf16.mxu0 0
        %647 = vmatpush1.bf16.msra.mxu0 0
        %648 = vmatprep.subr.bf16.mxu0 0
        %649 = vmatpush1.bf16.msra.mxu0 0
        %650 = vmatprep.subr.bf16.mxu0 0
        %651 = vmatpush1.bf16.msra.mxu0 0
        %652 = vmatprep.mubr.bf16.mxu0 0
        %653 = vmatmul.mubr.bf16.gmra.mrb[0].mxu0 %v567
        %v654 = vpop.f32.mrb[0].mxu0
        %v655 = vadd.f32 %v571, %v654
        %v656 = vpop.f32.mrb[0].mxu0
        %v657 = vpop.f32.mrb[0].mxu0
        %v658 = vadd.f32 %v571, %v657
        %v659 = vpop.f32.mrb[0].mxu0
        %660 = vdwg.mxu0
        %v661 = vadd.f32 %v655, %v658
        %v662 = vrot.slane %v661, 4
        %v663 = vadd.f32 %v661, %v662
        %v664 = vrot.slane %v663, 2
        %v665 = vadd.f32 %v663, %v664
        %v666 = vrot.slane %v665, 1
        %v667 = vadd.f32 %v665, %v666
        %v668 = vmul.f32 %v667, 0.0625
        %v669 = vmul.f32 %v655, %v655
        %v670 = vmul.f32 %v658, %v658
        %v671 = vadd.f32 %v669, %v670
        %v672 = vrot.slane %v671, 4
        %v673 = vadd.f32 %v671, %v672
        %v674 = vrot.slane %v673, 2
        %v675 = vadd.f32 %v673, %v674
        %v676 = vrot.slane %v675, 1
        %v677 = vadd.f32 %v675, %v676
        %v678 = vmul.f32 %v677, 0.0625
        %v679 = vmul.f32 %v668, %v668
        %v680 = vsub.f32 %v678, %v679
        %v681 = vmax.f32 %v680, 0.0
        %v682 = vsub.f32 %v655, %v668
        %v683 = vsub.f32 %v658, %v668
        %v684 = vadd.f32 %v681, 1e-05
        %v685 = vrsqrt.pop %v684
        %v686 = vmul.f32 %v682, %v685
        %v687 = vmul.f32 %v683, %v685
        %v688 = vlaneseq
        %v689 = vshrl.u32 %v688, 7
        %v690 = vsub.s32 2, %v689
        %v691 = vrot.slane %v418, %v690
        %v692 = vmul.f32 %v686, %v691
        %v693 = vmul.f32 %v687, %v691
        %v694 = vlaneseq
        %v695 = vshrl.u32 %v694, 7
        %v696 = vsub.s32 3, %v695
        %v697 = vrot.slane %v418, %v696
        %v698 = vadd.f32 %v692, %v697
        %v699 = vadd.f32 %v693, %v697
        %v700 = vmax.f32 %v698, 0.0
        %v701 = vmax.f32 %v699, 0.0
        %v702 = vpack.c.bf16 %v701, %v700
        %v719 = vunpack.c.l.b16 %v394
        %v720 = vunpack.c.l.b16 %v395
        %v721 = vunpack.c.l.b16 %v396
        %v722 = vunpack.c.l.b16 %v397
        %v723 = vunpack.c.l.b16 %v398
        %v724 = vunpack.c.l.b16 %v399
        %v725 = vunpack.c.l.b16 %v400
        %v726 = vunpack.c.l.b16 %v401
        %v727 = vunpack.c.l.b16 %v402
        %v728 = vunpack.c.l.b16 %v403
        %v729 = vunpack.c.l.b16 %v404
        %v730 = vunpack.c.l.b16 %v405
        %v731 = vunpack.c.l.b16 %v406
        %v732 = vunpack.c.l.b16 %v407
        %v733 = vunpack.c.l.b16 %v408
        %v734 = vunpack.c.l.b16 %v409
        %v735 = vpack.c.b16 %v720, %v719
        %v736 = vpack.c.b16 %v722, %v721
        %v737 = vpack.c.b16 %v724, %v723
        %v738 = vpack.c.b16 %v726, %v725
        %v739 = vpack.c.b16 %v728, %v727
        %v740 = vpack.c.b16 %v730, %v729
        %v741 = vpack.c.b16 %v732, %v731
        %v742 = vpack.c.b16 %v734, %v733
        %751 = vmatprep.subr.bf16.mxu0 0
        %752 = vmatpush1.bf16.msra.mxu0 %v735
        %753 = vmatprep.subr.bf16.mxu0 0
        %754 = vmatpush1.bf16.msra.mxu0 %v736
        %755 = vmatprep.subr.bf16.mxu0 0
        %756 = vmatpush1.bf16.msra.mxu0 %v737
        %757 = vmatprep.subr.bf16.mxu0 0
        %758 = vmatpush1.bf16.msra.mxu0 %v738
        %759 = vmatprep.subr.bf16.mxu0 0
        %760 = vmatpush1.bf16.msra.mxu0 %v739
        %761 = vmatprep.subr.bf16.mxu0 0
        %762 = vmatpush1.bf16.msra.mxu0 %v740
        %763 = vmatprep.subr.bf16.mxu0 0
        %764 = vmatpush1.bf16.msra.mxu0 %v741
        %765 = vmatprep.subr.bf16.mxu0 0
        %766 = vmatpush1.bf16.msra.mxu0 %v742
        %767 = vmatprep.subr.bf16.mxu0 0
        %768 = vmatpush1.bf16.msra.mxu0 0
        %769 = vmatprep.subr.bf16.mxu0 0
        %770 = vmatpush1.bf16.msra.mxu0 0
        %771 = vmatprep.subr.bf16.mxu0 0
        %772 = vmatpush1.bf16.msra.mxu0 0
        %773 = vmatprep.subr.bf16.mxu0 0
        %774 = vmatpush1.bf16.msra.mxu0 0
        %775 = vmatprep.subr.bf16.mxu0 0
        %776 = vmatpush1.bf16.msra.mxu0 0
        %777 = vmatprep.subr.bf16.mxu0 0
        %778 = vmatpush1.bf16.msra.mxu0 0
        %779 = vmatprep.subr.bf16.mxu0 0
        %780 = vmatpush1.bf16.msra.mxu0 0
        %781 = vmatprep.subr.bf16.mxu0 0
        %782 = vmatpush1.bf16.msra.mxu0 0
        %783 = vmatprep.mubr.bf16.mxu0 0
        %784 = vmatmul.mubr.bf16.gmra.mrb[0].mxu0 %v702
        %v785 = vpop.f32.mrb[0].mxu0
        %v786 = vadd.f32 0.0, %v785
        %v787 = vpop.f32.mrb[0].mxu0
        %v788 = vpop.f32.mrb[0].mxu0
        %v789 = vadd.f32 0.0, %v788
        %v790 = vpop.f32.mrb[0].mxu0
        %791 = vdwg.mxu0
        %v792 = vpack.c.bf16 %v789, %v786
        %795 = vrot.lane.b32.xlu0 %v786, 96
        %v796 = vpop.permute.xlu0 %795
        %797 = vrot.lane.b32.xlu0 %v789, 96
        %v798 = vpop.permute.xlu0 %797
        %801 = vmatprep.subr.bf16.mxu0 0
        %802 = vmatpush1.bf16.msra.mxu0 %v792
        %803 = vmatprep.subr.bf16.mxu0 0
        %804 = vmatpush1.bf16.msra.mxu0 0
        %805 = vmatprep.subr.bf16.mxu0 0
        %806 = vmatpush1.bf16.msra.mxu0 0
        %807 = vmatprep.subr.bf16.mxu0 0
        %808 = vmatpush1.bf16.msra.mxu0 0
        %809 = vmatprep.subr.bf16.mxu0 0
        %810 = vmatpush1.bf16.msra.mxu0 0
        %811 = vmatprep.subr.bf16.mxu0 0
        %812 = vmatpush1.bf16.msra.mxu0 0
        %813 = vmatprep.subr.bf16.mxu0 0
        %814 = vmatpush1.bf16.msra.mxu0 0
        %815 = vmatprep.subr.bf16.mxu0 0
        %816 = vmatpush1.bf16.msra.mxu0 0
        %817 = vmatprep.subr.bf16.mxu0 0
        %818 = vmatpush1.bf16.msra.mxu0 0
        %819 = vmatprep.subr.bf16.mxu0 0
        %820 = vmatpush1.bf16.msra.mxu0 0
        %821 = vmatprep.subr.bf16.mxu0 0
        %822 = vmatpush1.bf16.msra.mxu0 0
        %823 = vmatprep.subr.bf16.mxu0 0
        %824 = vmatpush1.bf16.msra.mxu0 0
        %825 = vmatprep.subr.bf16.mxu0 0
        %826 = vmatpush1.bf16.msra.mxu0 0
        %827 = vmatprep.subr.bf16.mxu0 0
        %828 = vmatpush1.bf16.msra.mxu0 0
        %829 = vmatprep.subr.bf16.mxu0 0
        %830 = vmatpush1.bf16.msra.mxu0 0
        %831 = vmatprep.subr.bf16.mxu0 0
        %832 = vmatpush1.bf16.msra.mxu0 0
        %833 = vmatprep.mubr.bf16.mxu0 0
        %834 = vmatmul.mubr.bf16.gmra.mrb[0].mxu0 %v513
        %v835 = vpop.f32.mrb[0].mxu0
        %v836 = vadd.f32 %v796, %v835
        %v837 = vpop.f32.mrb[0].mxu0
        %v838 = vpop.f32.mrb[0].mxu0
        %v839 = vadd.f32 %v798, %v838
        %v840 = vpop.f32.mrb[0].mxu0
        %841 = vdwg.mxu0
        %v842 = vlaneseq
        %v843 = vshrl.u32 %v842, 7
        %v844 = vsub.s32 4, %v843
        %v845 = vrot.slane %v418, %v844
        %v846 = vadd.f32 %v836, %v845
        %v847 = vadd.f32 %v839, %v845
        %vm848 = vcmask 261120
        %v849 = vsel %vm848, %v846, 0.0
        %v850 = vsel %vm848, %v847, 0.0
        %v851 = vadd.f32 %v849, %v850
        %v852 = vrot.slane %v851, 4
        %v853 = vadd.f32 %v851, %v852
        %v854 = vrot.slane %v853, 2
        %v855 = vadd.f32 %v853, %v854
        %v856 = vrot.slane %v855, 1
        %v857 = vadd.f32 %v855, %v856
        %v858 = vmul.f32 %v857, 0.0625
        %v859 = vmul.f32 %v846, %v846
        %v860 = vmul.f32 %v847, %v847
        %v861 = vsel %vm848, %v859, 0.0
        %v862 = vsel %vm848, %v860, 0.0
        %v863 = vadd.f32 %v861, %v862
        %v864 = vrot.slane %v863, 4
        %v865 = vadd.f32 %v863, %v864
        %v866 = vrot.slane %v865, 2
        %v867 = vadd.f32 %v865, %v866
        %v868 = vrot.slane %v867, 1
        %v869 = vadd.f32 %v867, %v868
        %v870 = vmul.f32 %v869, 0.0625
        %v871 = vmul.f32 %v858, %v858
        %v872 = vsub.f32 %v870, %v871
        %v873 = vmax.f32 %v872, 0.0
        %v874 = vsub.f32 %v846, %v858
        %v875 = vsub.f32 %v847, %v858
        %v876 = vadd.f32 %v873, 1e-05
        %v877 = vrsqrt.pop %v876
        %v878 = vmul.f32 %v874, %v877
        %v879 = vmul.f32 %v875, %v877
        %v880 = vlaneseq
        %v881 = vshrl.u32 %v880, 7
        %v882 = vsub.s32 5, %v881
        %v883 = vrot.slane %v418, %v882
        %v884 = vmul.f32 %v878, %v883
        %v885 = vmul.f32 %v879, %v883
        %v886 = vlaneseq
        %v887 = vshrl.u32 %v886, 7
        %v888 = vsub.s32 6, %v887
        %v889 = vrot.slane %v418, %v888
        %v890 = vadd.f32 %v884, %v889
        %v891 = vadd.f32 %v885, %v889
        %v892 = vmax.f32 %v890, 0.0
        %v893 = vmax.f32 %v891, 0.0
        %v894 = vld [vmem:[%s326] sm:$0x3]
        %v896 = vsel %vm424, %v894, 0
        %898 = vmatprep.subr.mxu0 0.0
        %899 = vmatpush1.msra.mxu0 %v892
        %900 = vmatprep.subr.mxu0 0.0
        %901 = vmatpush1.msra.mxu0 %v893
        %902 = vmatprep.subr.mxu0 0.0
        %903 = vmatpush1.msra.mxu0 0.0
        %904 = vmatprep.subr.mxu0 0.0
        %905 = vmatpush1.msra.mxu0 0.0
        %906 = vmatprep.subr.mxu0 0.0
        %907 = vmatpush1.msra.mxu0 0.0
        %908 = vmatprep.subr.mxu0 0.0
        %909 = vmatpush1.msra.mxu0 0.0
        %910 = vmatprep.subr.mxu0 0.0
        %911 = vmatpush1.msra.mxu0 0.0
        %912 = vmatprep.subr.mxu0 0.0
        %913 = vmatpush1.msra.mxu0 0.0
        %914 = vmatprep.subr.mxu0 0.0
        %915 = vmatpush1.msra.mxu0 0.0
        %916 = vmatprep.subr.mxu0 0.0
        %917 = vmatpush1.msra.mxu0 0.0
        %918 = vmatprep.subr.mxu0 0.0
        %919 = vmatpush1.msra.mxu0 0.0
        %920 = vmatprep.subr.mxu0 0.0
        %921 = vmatpush1.msra.mxu0 0.0
        %922 = vmatprep.subr.mxu0 0.0
        %923 = vmatpush1.msra.mxu0 0.0
        %924 = vmatprep.subr.mxu0 0.0
        %925 = vmatpush1.msra.mxu0 0.0
        %926 = vmatprep.subr.mxu0 0.0
        %927 = vmatpush1.msra.mxu0 0.0
        %928 = vmatprep.subr.mxu0 0.0
        %929 = vmatpush1.msra.mxu0 0.0
        %930 = vmatprep.subr.mxu0 0.0
        %931 = vmatpush1.msra.mxu0 0.0
        %932 = vmatprep.subr.mxu0 0.0
        %933 = vmatpush1.msra.mxu0 0.0
        %934 = vmatprep.subr.mxu0 0.0
        %935 = vmatpush1.msra.mxu0 0.0
        %936 = vmatprep.subr.mxu0 0.0
        %937 = vmatpush1.msra.mxu0 0.0
        %938 = vmatprep.subr.mxu0 0.0
        %939 = vmatpush1.msra.mxu0 0.0
        %940 = vmatprep.subr.mxu0 0.0
        %941 = vmatpush1.msra.mxu0 0.0
        %942 = vmatprep.subr.mxu0 0.0
        %943 = vmatpush1.msra.mxu0 0.0
        %944 = vmatprep.subr.mxu0 0.0
        %945 = vmatpush1.msra.mxu0 0.0
        %946 = vmatprep.subr.mxu0 0.0
        %947 = vmatpush1.msra.mxu0 0.0
        %948 = vmatprep.subr.mxu0 0.0
        %949 = vmatpush1.msra.mxu0 0.0
        %950 = vmatprep.subr.mxu0 0.0
        %951 = vmatpush1.msra.mxu0 0.0
        %952 = vmatprep.subr.mxu0 0.0
        %953 = vmatpush1.msra.mxu0 0.0
        %954 = vmatprep.subr.mxu0 0.0
        %955 = vmatpush1.msra.mxu0 0.0
        %956 = vmatprep.subr.mxu0 0.0
        %957 = vmatpush1.msra.mxu0 0.0
        %958 = vmatprep.subr.mxu0 0.0
        %959 = vmatpush1.msra.mxu0 0.0
        %960 = vmatprep.subr.mxu0 0.0
        %961 = vmatpush1.msra.mxu0 0.0
        %962 = vmatprep.mubr.f32.mxu0 0.0
        %963 = vmatmul.mubr.f32.gmra.mrb[0].mxu0 %v896
        %v964 = vpop.f32.mrb[0].mxu0
        %v965 = vadd.f32 0.0, %v964
        %v966 = vpop.f32.mrb[0].mxu0
        %967 = vdwg.mxu0
        %v968 = vlaneseq
        %v969 = vshrl.u32 %v968, 7
        %v970 = vsub.s32 7, %v969
        %v971 = vrot.slane %v418, %v970
        %v973 = vsel %vm848, %v965, 0
        %975 = vmatprep.subr.mxu0 0.0
        %976 = vmatpush1.msra.mxu0 %v412
        %977 = vmatprep.subr.mxu0 0.0
        %978 = vmatpush1.msra.mxu0 %v413
        %979 = vmatprep.subr.mxu0 0.0
        %980 = vmatpush1.msra.mxu0 %v414
        %981 = vmatprep.subr.mxu0 0.0
        %982 = vmatpush1.msra.mxu0 %v415
        %983 = vmatprep.subr.mxu0 0.0
        %984 = vmatpush1.msra.mxu0 0.0
        %985 = vmatprep.subr.mxu0 0.0
        %986 = vmatpush1.msra.mxu0 0.0
        %987 = vmatprep.subr.mxu0 0.0
        %988 = vmatpush1.msra.mxu0 0.0
        %989 = vmatprep.subr.mxu0 0.0
        %990 = vmatpush1.msra.mxu0 0.0
        %991 = vmatprep.subr.mxu0 0.0
        %992 = vmatpush1.msra.mxu0 0.0
        %993 = vmatprep.subr.mxu0 0.0
        %994 = vmatpush1.msra.mxu0 0.0
        %995 = vmatprep.subr.mxu0 0.0
        %996 = vmatpush1.msra.mxu0 0.0
        %997 = vmatprep.subr.mxu0 0.0
        %998 = vmatpush1.msra.mxu0 0.0
        %999 = vmatprep.subr.mxu0 0.0
        %1000 = vmatpush1.msra.mxu0 0.0
        %1001 = vmatprep.subr.mxu0 0.0
        %1002 = vmatpush1.msra.mxu0 0.0
        %1003 = vmatprep.subr.mxu0 0.0
        %1004 = vmatpush1.msra.mxu0 0.0
        %1005 = vmatprep.subr.mxu0 0.0
        %1006 = vmatpush1.msra.mxu0 0.0
        %1007 = vmatprep.subr.mxu0 0.0
        %1008 = vmatpush1.msra.mxu0 0.0
        %1009 = vmatprep.subr.mxu0 0.0
        %1010 = vmatpush1.msra.mxu0 0.0
        %1011 = vmatprep.subr.mxu0 0.0
        %1012 = vmatpush1.msra.mxu0 0.0
        %1013 = vmatprep.subr.mxu0 0.0
        %1014 = vmatpush1.msra.mxu0 0.0
        %1015 = vmatprep.subr.mxu0 0.0
        %1016 = vmatpush1.msra.mxu0 0.0
        %1017 = vmatprep.subr.mxu0 0.0
        %1018 = vmatpush1.msra.mxu0 0.0
        %1019 = vmatprep.subr.mxu0 0.0
        %1020 = vmatpush1.msra.mxu0 0.0
        %1021 = vmatprep.subr.mxu0 0.0
        %1022 = vmatpush1.msra.mxu0 0.0
        %1023 = vmatprep.subr.mxu0 0.0
        %1024 = vmatpush1.msra.mxu0 0.0
        %1025 = vmatprep.subr.mxu0 0.0
        %1026 = vmatpush1.msra.mxu0 0.0
        %1027 = vmatprep.subr.mxu0 0.0
        %1028 = vmatpush1.msra.mxu0 0.0
        %1029 = vmatprep.subr.mxu0 0.0
        %1030 = vmatpush1.msra.mxu0 0.0
        %1031 = vmatprep.subr.mxu0 0.0
        %1032 = vmatpush1.msra.mxu0 0.0
        %1033 = vmatprep.subr.mxu0 0.0
        %1034 = vmatpush1.msra.mxu0 0.0
        %1035 = vmatprep.subr.mxu0 0.0
        %1036 = vmatpush1.msra.mxu0 0.0
        %1037 = vmatprep.subr.mxu0 0.0
        %1038 = vmatpush1.msra.mxu0 0.0
        %1039 = vmatprep.mubr.f32.mxu0 0.0
        %1040 = vmatmul.mubr.f32.gmra.mrb[0].mxu0 %v973
        %v1041 = vpop.f32.mrb[0].mxu0
        %v1042 = vadd.f32 %v971, %v1041
        %v1043 = vpop.f32.mrb[0].mxu0
        %1044 = vdwg.mxu0
        %v1045 = vmax.f32 %v1042, 0.0
        %v1046 = vlaneseq
        %v1047 = vshrl.u32 %v1046, 7
        %v1048 = vsub.s32 0, %v1047
        %v1049 = vrot.slane %v419, %v1048
        %v1051 = vsel %vm424, %v1045, 0
        %1053 = vmatprep.subr.mxu0 0.0
        %1054 = vmatpush1.msra.mxu0 %v416
        %1055 = vmatprep.subr.mxu0 0.0
        %1056 = vmatpush1.msra.mxu0 %v417
        %1057 = vmatprep.subr.mxu0 0.0
        %1058 = vmatpush1.msra.mxu0 0.0
        %1059 = vmatprep.subr.mxu0 0.0
        %1060 = vmatpush1.msra.mxu0 0.0
        %1061 = vmatprep.subr.mxu0 0.0
        %1062 = vmatpush1.msra.mxu0 0.0
        %1063 = vmatprep.subr.mxu0 0.0
        %1064 = vmatpush1.msra.mxu0 0.0
        %1065 = vmatprep.subr.mxu0 0.0
        %1066 = vmatpush1.msra.mxu0 0.0
        %1067 = vmatprep.subr.mxu0 0.0
        %1068 = vmatpush1.msra.mxu0 0.0
        %1069 = vmatprep.subr.mxu0 0.0
        %1070 = vmatpush1.msra.mxu0 0.0
        %1071 = vmatprep.subr.mxu0 0.0
        %1072 = vmatpush1.msra.mxu0 0.0
        %1073 = vmatprep.subr.mxu0 0.0
        %1074 = vmatpush1.msra.mxu0 0.0
        %1075 = vmatprep.subr.mxu0 0.0
        %1076 = vmatpush1.msra.mxu0 0.0
        %1077 = vmatprep.subr.mxu0 0.0
        %1078 = vmatpush1.msra.mxu0 0.0
        %1079 = vmatprep.subr.mxu0 0.0
        %1080 = vmatpush1.msra.mxu0 0.0
        %1081 = vmatprep.subr.mxu0 0.0
        %1082 = vmatpush1.msra.mxu0 0.0
        %1083 = vmatprep.subr.mxu0 0.0
        %1084 = vmatpush1.msra.mxu0 0.0
        %1085 = vmatprep.subr.mxu0 0.0
        %1086 = vmatpush1.msra.mxu0 0.0
        %1087 = vmatprep.subr.mxu0 0.0
        %1088 = vmatpush1.msra.mxu0 0.0
        %1089 = vmatprep.subr.mxu0 0.0
        %1090 = vmatpush1.msra.mxu0 0.0
        %1091 = vmatprep.subr.mxu0 0.0
        %1092 = vmatpush1.msra.mxu0 0.0
        %1093 = vmatprep.subr.mxu0 0.0
        %1094 = vmatpush1.msra.mxu0 0.0
        %1095 = vmatprep.subr.mxu0 0.0
        %1096 = vmatpush1.msra.mxu0 0.0
        %1097 = vmatprep.subr.mxu0 0.0
        %1098 = vmatpush1.msra.mxu0 0.0
        %1099 = vmatprep.subr.mxu0 0.0
        %1100 = vmatpush1.msra.mxu0 0.0
        %1101 = vmatprep.subr.mxu0 0.0
        %1102 = vmatpush1.msra.mxu0 0.0
        %1103 = vmatprep.subr.mxu0 0.0
        %1104 = vmatpush1.msra.mxu0 0.0
        %1105 = vmatprep.subr.mxu0 0.0
        %1106 = vmatpush1.msra.mxu0 0.0
        %1107 = vmatprep.subr.mxu0 0.0
        %1108 = vmatpush1.msra.mxu0 0.0
        %1109 = vmatprep.subr.mxu0 0.0
        %1110 = vmatpush1.msra.mxu0 0.0
        %1111 = vmatprep.subr.mxu0 0.0
        %1112 = vmatpush1.msra.mxu0 0.0
        %1113 = vmatprep.subr.mxu0 0.0
        %1114 = vmatpush1.msra.mxu0 0.0
        %1115 = vmatprep.subr.mxu0 0.0
        %1116 = vmatpush1.msra.mxu0 0.0
        %1117 = vmatprep.mubr.f32.mxu0 0.0
        %1118 = vmatmul.mubr.f32.gmra.mrb[0].mxu0 %v1051
        %v1119 = vpop.f32.mrb[0].mxu0
        %v1120 = vadd.f32 %v1049, %v1119
        %v1121 = vpop.f32.mrb[0].mxu0
        %1122 = vdwg.mxu0
        %1123 = vst [vmem:[%s372] sm:$0x3] %v1120
        %s1124 = sand.u32 %s176, 1
        %s1125 = scalar_lea.sflag [#allocation4], %s1124
        %s1126 = sand.u32 %s176, 1
        %s1127 = smul.addr %s1126, 2
        %s1128 = scalar_lea.vmem [#allocation11], %s1127
        // Predicated region
        $region65: #{tpu_custom_call.1} parent=43 // pred_check
          %p1129 = pneg %p186
        $region66: #{tpu_custom_call.1} parent=43 // pred_check_branch
          %1131 = sbr.rel (%p1129) target = $region68
        $region67: #{tpu_custom_call.1} parent=43 // pred_region
          %s1133 = ssub.s32 32, 32
          %1134 = vsyncadd %s1125, %s1133
          %s1135 = smul.addr %s27, 32
          %s1136 = scalar_lea.hbm %s6, %s1135
          %s1138 = sshll.u32 %s1128, 4
          %s1139 = int_to_ptr.vmem [resolvable:$true] %s1138
          %1141 = dma.vmem_to_hbm [thread:$0]  %s1139, 32, %s1136, %s1125
        $region68: #{tpu_custom_call.1} parent=43 // pred_fallthru
          _
      $region44: #{tpu_custom_call.1} parent=5 // pred_fallthru
        _
      %p1142 = scmp.le.s32.totalorder 2, %s22
      // Predicated region
      $region69: #{tpu_custom_call.1} parent=5 // pred_check
        %p1143 = pneg %p1142
      $region70: #{tpu_custom_call.1} parent=5 // pred_check_branch
        %1145 = sbr.rel (%p1143) target = $region72
      $region71: #{tpu_custom_call.1} parent=5 // pred_region
        %s1146 = ssub.s32 %s22, 2
        // Predicated region
        $region73: #{tpu_custom_call.1} parent=71 // pred_check
          %p1147 = pneg %p192
        $region74: #{tpu_custom_call.1} parent=71 // pred_check_branch
          %1149 = sbr.rel (%p1147) target = $region76
        $region75: #{tpu_custom_call.1} parent=71 // pred_region
          %s1150 = sand.u32 %s177, 1
          %s1151 = scalar_lea.sflag [#allocation4], %s1150
          %s1152 = sand.u32 %s177, 1
          %s1153 = smul.addr %s1152, 2
          %s1154 = scalar_lea.vmem [#allocation11], %s1153
          %1155 = dma.done %s1151, 32
        $region76: #{tpu_custom_call.1} parent=71 // pred_fallthru
          _
      $region72: #{tpu_custom_call.1} parent=5 // pred_fallthru
        _
    $region6: #{tpu_custom_call.1} parent=1 // loop_footer
      %s26 = sadd.s32 1, %s22
    $region7: #{tpu_custom_call.1} parent=1 // loop_footer_branch
      %21 = sbr.rel target = $region3
    $region8: #{tpu_custom_call.1} parent=1 // loop_exit
      _
    %1156 = vsyncpa [#allocation3], 1
    %s1157 = scalar_lea.sflag [#allocation3], 1
    %1158 = vsyncpa %s1157, 1
    %1159 = vsyncpa [#allocation6], 1
    %s1160 = scalar_lea.sflag [#allocation6], 1
    %1161 = vsyncpa %s1160, 1
    %1162 = vsyncpa [#allocation9], 1
    %1163 = vsyncpa [#allocation4], 1
    %s1164 = scalar_lea.sflag [#allocation4], 1
    %1165 = vsyncpa %s1164, 1

</llo_original>
